<compile_context>
chip_gen: v7x
topology: tpu7x:2x2x1
jax: 0.10.0
libtpu: 0.0.40
codegen_flags: <defaults>
</compile_context>

<pallas_src>
import functools

import jax
import jax.numpy as jnp
from jax.experimental import pallas as pl
from jax.experimental.pallas import tpu as pltpu

LN_EPS = 1e-5


def image_proj_kernel(x_ref, w_ref, b_ref, g_ref, beta_ref, o_ref, *, fuse, d):
    # x:(B,E)  w:(E,fuse*D) (this step's token-major slab)
    # b/g/beta:(1,fuse*D)   o:(B,fuse*D)
    # MXU matmul in native operand dtype, f32 accumulation.
    y = jnp.dot(x_ref[...], w_ref[...], preferred_element_type=jnp.float32)  # (B, fuse*D)
    y = y + b_ref[...].astype(jnp.float32)   # bias before LN (affects mean, as in PyTorch)

    # Per-token LayerNorm on static, 128-aligned lane slices (no relayout).
    parts = []
    for i in range(fuse):
        yi = y[:, i * d:(i + 1) * d]
        mean = jnp.mean(yi, axis=-1, keepdims=True)
        centered = yi - mean
        var = jnp.mean(centered * centered, axis=-1, keepdims=True)   # biased var (nn.LayerNorm)
        parts.append(centered * jax.lax.rsqrt(var + LN_EPS))          # rsqrt -> EUP slot
    y_norm = parts[0] if fuse == 1 else jnp.concatenate(parts, axis=-1)

    gamma = g_ref[...].astype(jnp.float32)    # (1, fuse*D), tiled in the wrapper
    beta = beta_ref[...].astype(jnp.float32)
    o_ref[...] = (y_norm * gamma + beta).astype(o_ref.dtype)   # single lane-dense store


def image_proj_model(image_embeds, w, b, gamma, beta, *, tokens, cross_dim,
                     tokens_per_step=None, out_dtype=jnp.float32):
    B, E = image_embeds.shape
    T, D = tokens, cross_dim
    if w.shape != (E, T * D):
        raise ValueError(f"expected w of shape {(E, T * D)}, got {w.shape}")
    if D % 128 != 0:
        raise ValueError(
            f"cross_attention_dim={D} must be a multiple of the 128 lane width "
            "(standard 768/1024/1280/2048 configs are fine); pad or extend the kernel.")

    # Token-fusion factor: 2 keeps >=2 grid steps for T=4 (v7x megacore);
    # on single-TC v5e/v6e you may pass tokens_per_step=T to fuse everything.
    if tokens_per_step is None:
        tokens_per_step = 2 if T % 2 == 0 else 1
    k = tokens_per_step
    if T % k != 0:
        raise ValueError(f"tokens_per_step={k} must divide tokens={T}")
    n_steps = T // k

    # Pre-permute W to a token-major, per-step-contiguous layout:
    #   (E, T*D) -> (T//k, E, k*D).  One contiguous DMA per grid step.
    w_tok = jnp.transpose(w.reshape(E, n_steps, k * D), (1, 0, 2))

    b2 = b.reshape(1, T * D)
    g2 = jnp.tile(gamma.reshape(1, D), (1, k))      # (1, k*D), resident
    beta2 = jnp.tile(beta.reshape(1, D), (1, k))    # (1, k*D), resident

    out_itemsize = jnp.dtype(out_dtype).itemsize
    cost = pl.CostEstimate(
        flops=2 * B * E * T * D,
        transcendentals=B * T,  # one rsqrt per (batch, token) row
        bytes_accessed=(image_embeds.size * image_embeds.dtype.itemsize
                        + w_tok.size * w_tok.dtype.itemsize
                        + b2.size * b2.dtype.itemsize
                        + (g2.size + beta2.size) * g2.dtype.itemsize
                        + B * T * D * out_itemsize),
    )

    # VMEM budget: double-buffered W / bias / out tiles + resident x/gamma/beta.
    # Only raise the scoped limit when it would exceed v5e's 16 MiB default,
    # and stay well under v7x's 64 MiB physical VMEM.
    w_tile = E * k * D * w_tok.dtype.itemsize
    out_tile = B * k * D * out_itemsize
    bias_tile = k * D * b2.dtype.itemsize
    resident = (image_embeds.size * image_embeds.dtype.itemsize
                + (g2.size + beta2.size) * g2.dtype.itemsize)
    vmem_needed = 2 * (w_tile + out_tile + bias_tile + resident) + (2 << 20)
    vmem_limit = min(int(vmem_needed), 56 << 20) if vmem_needed > (16 << 20) else None

    y_flat = pl.pallas_call(
        functools.partial(image_proj_kernel, fuse=k, d=D),
        out_shape=jax.ShapeDtypeStruct((B, T * D), out_dtype),
        grid=(n_steps,),
        in_specs=[
            pl.BlockSpec((B, E), lambda j: (0, 0)),                        # x: resident
            pl.BlockSpec((pl.Squeezed(), E, k * D), lambda j: (j, 0, 0)),  # W: contiguous slab / step
            pl.BlockSpec((1, k * D), lambda j: (0, j)),                    # bias slice for these tokens
            pl.BlockSpec((1, k * D), lambda j: (0, 0)),                    # gamma: resident
            pl.BlockSpec((1, k * D), lambda j: (0, 0)),                    # beta: resident
        ],
        out_specs=pl.BlockSpec((B, k * D), lambda j: (0, j)),              # lane-dense output slab
        compiler_params=pltpu.CompilerParams(
            dimension_semantics=("parallel",),   # distinct output per step -> megacore-shardable
            vmem_limit_bytes=vmem_limit,
        ),
        cost_estimate=cost,
    )(image_embeds, w_tok, b2, g2, beta2)

    # Trivial metadata-level reshape outside the kernel hot path.
    return y_flat.reshape(B, T, D)


def reference(image_embeds, w, b, gamma, beta, *, tokens, cross_dim):
    y = image_embeds.astype(jnp.float32) @ w.astype(jnp.float32) + b.astype(jnp.float32)
    y = y.reshape(-1, tokens, cross_dim)
    mean = jnp.mean(y, axis=-1, keepdims=True)
    var = jnp.mean((y - mean) ** 2, axis=-1, keepdims=True)
    return (y - mean) * jax.lax.rsqrt(var + LN_EPS) * gamma + beta


if __name__ == "__main__":
    # Small shapes consistent with the module's forward
    # (cross_attention_dim=clip_embeddings_dim scaled down, 4 extra tokens).
    B = 2        # batch
    E = 256      # clip_embeddings_dim
    D = 256      # cross_attention_dim
    T = 4        # clip_extra_context_tokens

    key = jax.random.PRNGKey(0)
    k_x, k_w, k_b, k_g, k_be = jax.random.split(key, 5)

    # bf16 activations / weights (native MXU path, half the HBM traffic for W);
    # f32 LayerNorm parameters and f32 output.
    image_embeds = jax.random.normal(k_x, (B, E), dtype=jnp.float32).astype(jnp.bfloat16)
    w = (jax.random.normal(k_w, (E, T * D), dtype=jnp.float32)
         * (1.0 / jnp.sqrt(E))).astype(jnp.bfloat16)
    b = jax.random.normal(k_b, (T * D,), dtype=jnp.float32) * 0.02
    gamma = 1.0 + 0.1 * jax.random.normal(k_g, (D,), dtype=jnp.float32)
    beta = 0.1 * jax.random.normal(k_be, (D,), dtype=jnp.float32)

    out = image_proj_model(image_embeds, w, b, gamma, beta, tokens=T, cross_dim=D)
    out = jax.block_until_ready(out)

    ref = reference(image_embeds, w, b, gamma, beta, tokens=T, cross_dim=D)
    assert out.shape == (B, T, D)
    assert jnp.allclose(out, ref, atol=2e-3, rtol=2e-3), float(jnp.max(jnp.abs(out - ref)))

    print("KERNEL_OK")
</pallas_src>

<mosaic_0001>
module attributes {stable_mosaic.version = 11 : i64} {
  func.func @image_proj_kernel(%arg0: i32, %arg1: memref<2x256xbf16, #tpu.memory_space<vmem>>, %arg2: memref<1x256x512xbf16, #tpu.memory_space<vmem>>, %arg3: memref<1x512xf32, #tpu.memory_space<vmem>>, %arg4: memref<1x512xf32, #tpu.memory_space<vmem>>, %arg5: memref<1x512xf32, #tpu.memory_space<vmem>>, %arg6: memref<2x512xf32, #tpu.memory_space<vmem>>) attributes {dimension_semantics = [#tpu.dimension_semantics<parallel>], iteration_bounds = array<i64: 2>, scalar_prefetch = 0 : i64, scratch_operands = 0 : i64, tpu.core_type = #tpu.core_type<tc>, window_params = [{pipeline_mode = #tpu.pipeline_mode<synchronous>, transform_indices = @transform_0, window_bounds = array<i64: 2, 256>}, {transform_indices = @transform_1, window_bounds = array<i64: 1, 256, 512>}, {transform_indices = @transform_2, window_bounds = array<i64: 1, 512>}, {pipeline_mode = #tpu.pipeline_mode<synchronous>, transform_indices = @transform_3, window_bounds = array<i64: 1, 512>}, {pipeline_mode = #tpu.pipeline_mode<synchronous>, transform_indices = @transform_4, window_bounds = array<i64: 1, 512>}, {transform_indices = @transform_5, window_bounds = array<i64: 2, 512>}]} {
    %c0 = arith.constant 0 : index
    %c0_0 = arith.constant 0 : index
    %0 = vector.load %arg1[%c0, %c0_0] : memref<2x256xbf16, #tpu.memory_space<vmem>>, vector<2x256xbf16>
    %c0_1 = arith.constant 0 : index
    %c0_2 = arith.constant 0 : index
    %c0_3 = arith.constant 0 : index
    %1 = vector.load %arg2[%c0_1, %c0_2, %c0_3] : memref<1x256x512xbf16, #tpu.memory_space<vmem>>, vector<1x256x512xbf16>
    %2 = vector.shape_cast %1 : vector<1x256x512xbf16> to vector<256x512xbf16>
    %cst = arith.constant dense<0.000000e+00> : vector<2x512xf32>
    %3 = tpu.matmul %0, %2, %cst {dimension_numbers = #tpu.dot_dimension_numbers<[1], [0], [0], [1], [0, 0, 1, 1], [], []>} : vector<2x256xbf16>, vector<256x512xbf16>, vector<2x512xf32> -> vector<2x512xf32>
    %c0_4 = arith.constant 0 : index
    %c0_5 = arith.constant 0 : index
    %4 = vector.load %arg3[%c0_4, %c0_5] : memref<1x512xf32, #tpu.memory_space<vmem>>, vector<1x512xf32>
    %5 = vector.broadcast %4 : vector<1x512xf32> to vector<2x512xf32>
    %6 = arith.addf %3, %5 : vector<2x512xf32>
    %7 = vector.extract_strided_slice %6 {offsets = [0, 0], sizes = [2, 256], strides = [1, 1]} : vector<2x512xf32> to vector<2x256xf32>
    %cst_6 = arith.constant dense<0.000000e+00> : vector<2xf32>
    %8 = vector.multi_reduction <add>, %7, %cst_6 [1] : vector<2x256xf32> to vector<2xf32>
    %9 = vector.shape_cast %8 : vector<2xf32> to vector<2x1xf32>
    %cst_7 = arith.constant 2.560000e+02 : f32
    %10 = vector.broadcast %cst_7 : f32 to vector<2x1xf32>
    %11 = arith.divf %9, %10 : vector<2x1xf32>
    %12 = vector.broadcast %11 : vector<2x1xf32> to vector<2x256xf32>
    %13 = arith.subf %7, %12 : vector<2x256xf32>
    %14 = arith.mulf %13, %13 : vector<2x256xf32>
    %cst_8 = arith.constant dense<0.000000e+00> : vector<2xf32>
    %15 = vector.multi_reduction <add>, %14, %cst_8 [1] : vector<2x256xf32> to vector<2xf32>
    %16 = vector.shape_cast %15 : vector<2xf32> to vector<2x1xf32>
    %cst_9 = arith.constant 2.560000e+02 : f32
    %17 = vector.broadcast %cst_9 : f32 to vector<2x1xf32>
    %18 = arith.divf %16, %17 : vector<2x1xf32>
    %cst_10 = arith.constant 9.99999974E-6 : f32
    %19 = vector.broadcast %cst_10 : f32 to vector<2x1xf32>
    %20 = arith.addf %18, %19 : vector<2x1xf32>
    %21 = math.rsqrt %20 : vector<2x1xf32>
    %22 = vector.broadcast %21 : vector<2x1xf32> to vector<2x256xf32>
    %23 = arith.mulf %13, %22 : vector<2x256xf32>
    %24 = vector.extract_strided_slice %6 {offsets = [0, 256], sizes = [2, 256], strides = [1, 1]} : vector<2x512xf32> to vector<2x256xf32>
    %cst_11 = arith.constant dense<0.000000e+00> : vector<2xf32>
    %25 = vector.multi_reduction <add>, %24, %cst_11 [1] : vector<2x256xf32> to vector<2xf32>
    %26 = vector.shape_cast %25 : vector<2xf32> to vector<2x1xf32>
    %cst_12 = arith.constant 2.560000e+02 : f32
    %27 = vector.broadcast %cst_12 : f32 to vector<2x1xf32>
    %28 = arith.divf %26, %27 : vector<2x1xf32>
    %29 = vector.broadcast %28 : vector<2x1xf32> to vector<2x256xf32>
    %30 = arith.subf %24, %29 : vector<2x256xf32>
    %31 = arith.mulf %30, %30 : vector<2x256xf32>
    %cst_13 = arith.constant dense<0.000000e+00> : vector<2xf32>
    %32 = vector.multi_reduction <add>, %31, %cst_13 [1] : vector<2x256xf32> to vector<2xf32>
    %33 = vector.shape_cast %32 : vector<2xf32> to vector<2x1xf32>
    %cst_14 = arith.constant 2.560000e+02 : f32
    %34 = vector.broadcast %cst_14 : f32 to vector<2x1xf32>
    %35 = arith.divf %33, %34 : vector<2x1xf32>
    %cst_15 = arith.constant 9.99999974E-6 : f32
    %36 = vector.broadcast %cst_15 : f32 to vector<2x1xf32>
    %37 = arith.addf %35, %36 : vector<2x1xf32>
    %38 = math.rsqrt %37 : vector<2x1xf32>
    %39 = vector.broadcast %38 : vector<2x1xf32> to vector<2x256xf32>
    %40 = arith.mulf %30, %39 : vector<2x256xf32>
    %41 = tpu.concatenate %23, %40 in 1 : vector<2x256xf32>, vector<2x256xf32> -> vector<2x512xf32>
    %c0_16 = arith.constant 0 : index
    %c0_17 = arith.constant 0 : index
    %42 = vector.load %arg4[%c0_16, %c0_17] : memref<1x512xf32, #tpu.memory_space<vmem>>, vector<1x512xf32>
    %c0_18 = arith.constant 0 : index
    %c0_19 = arith.constant 0 : index
    %43 = vector.load %arg5[%c0_18, %c0_19] : memref<1x512xf32, #tpu.memory_space<vmem>>, vector<1x512xf32>
    %44 = vector.broadcast %42 : vector<1x512xf32> to vector<2x512xf32>
    %45 = arith.mulf %41, %44 : vector<2x512xf32>
    %46 = vector.broadcast %43 : vector<1x512xf32> to vector<2x512xf32>
    %47 = arith.addf %45, %46 : vector<2x512xf32>
    %c0_20 = arith.constant 0 : index
    %c0_21 = arith.constant 0 : index
    %48 = vector.load %arg6[%c0_20, %c0_21] : memref<2x512xf32, #tpu.memory_space<vmem>>, vector<2x512xf32>
    tpu.vector_store %arg6[%c0_20, %c0_21], %47 {strides = array<i32>} : memref<2x512xf32, #tpu.memory_space<vmem>>, vector<2x512xf32>,
    return
  }
  func.func @transform_0(%arg0: i32) -> (i32, i32) {
    %c0_i32 = arith.constant 0 : i32
    %c0_i32_0 = arith.constant 0 : i32
    %c0_i32_1 = arith.constant 0 : i32
    return %c0_i32, %c0_i32_0 : i32, i32
  }
  func.func @transform_1(%arg0: i32) -> (i32, i32, i32) {
    %c0_i32 = arith.constant 0 : i32
    %c0_i32_0 = arith.constant 0 : i32
    %c0_i32_1 = arith.constant 0 : i32
    return %arg0, %c0_i32, %c0_i32_0 : i32, i32, i32
  }
  func.func @transform_2(%arg0: i32) -> (i32, i32) {
    %c0_i32 = arith.constant 0 : i32
    %c0_i32_0 = arith.constant 0 : i32
    return %c0_i32, %arg0 : i32, i32
  }
  func.func @transform_3(%arg0: i32) -> (i32, i32) {
    %c0_i32 = arith.constant 0 : i32
    %c0_i32_0 = arith.constant 0 : i32
    %c0_i32_1 = arith.constant 0 : i32
    return %c0_i32, %c0_i32_0 : i32, i32
  }
  func.func @transform_4(%arg0: i32) -> (i32, i32) {
    %c0_i32 = arith.constant 0 : i32
    %c0_i32_0 = arith.constant 0 : i32
    %c0_i32_1 = arith.constant 0 : i32
    return %c0_i32, %c0_i32_0 : i32, i32
  }
  func.func @transform_5(%arg0: i32) -> (i32, i32) {
    %c0_i32 = arith.constant 0 : i32
    %c0_i32_0 = arith.constant 0 : i32
    return %c0_i32, %arg0 : i32, i32
  }
}

</mosaic_0001>

<llo_original>
// kernel: tpu_custom_call.1
$region0: #{tpu_custom_call.1}
  #allocation0 [shape = 'u32[]', space=smem, size = 0x4, offset = 0x4, fixed_abs, tag = 'smem constant byte address 0x4 - core index']
  #allocation1 [shape = 'u32[144,128]{1,0:T(1,128)}', space=vmem, size = 0x12000, scoped, tag = 'internal scratch']
  %s0 = inlined_call_operand.hbm [shape: bf16[2,256], index: 0, kind: input, shape index: {}]
  %s1 = inlined_call_operand.hbm [shape: bf16[2,256,512], index: 1, kind: input, shape index: {}]
  %s2 = inlined_call_operand.hbm [shape: f32[1,1024], index: 2, kind: input, shape index: {}]
  %s3 = inlined_call_operand.vmem [shape: f32[1,512], index: 3, kind: input, shape index: {}]
  %s4 = inlined_call_operand.vmem [shape: f32[1,512], index: 4, kind: input, shape index: {}]
  %s5 = inlined_call_operand.hbm [shape: f32[2,1024], index: 5, kind: output, shape index: {}]
  %s6 = sld [smem:[#allocation0]]
  $region65: #{tpu_custom_call.1} parent=0
    _
  %s8 = ssub.s32 1, %s6
  %s9 = scalar_select 0, %s8, %s6
  $region1: #{tpu_custom_call.1} parent=0
    #allocation2 [shape = 'u8[1024]{0}', space=vmem, size = 0x400, scoped, tag = 'input window, operand 0, single buffered']
    #allocation3 [shape = 's32[2]{0}', space=sflag, size = 0x8, scoped, tag = 'scoped memory for tpu_custom_call.1']
    #allocation4 [shape = 's32[2]{0}', space=sflag, size = 0x8, scoped, tag = 'scoped memory for tpu_custom_call.1']
    #allocation5 [shape = 'u8[524288]{0}', space=vmem, size = 0x80000, scoped, tag = 'input window, operand 1']
    #allocation6 [shape = 's32[2]{0}', space=sflag, size = 0x8, scoped, tag = 'scoped memory for tpu_custom_call.1']
    #allocation7 [shape = 'u8[4096]{0}', space=vmem, size = 0x1000, scoped, tag = 'input window, operand 2']
    #allocation8 [shape = 'u8[8192]{0}', space=vmem, size = 0x2000, scoped, tag = 'output window, operand 0']
    %10 = vsyncpa [#allocation3], 0
    %11 = vsyncpa [#allocation6], 0
    %s12 = scalar_lea.sflag [#allocation6], 1
    %13 = vsyncpa %s12, 0
    %14 = vsyncpa [#allocation4], 0
    %s15 = scalar_lea.sflag [#allocation4], 1
    %16 = vsyncpa %s15, 0
    loop: start=0, step=1, limit=4
    $region2: #{tpu_custom_call.1} parent=1 // loop_pre_header
      _
    $region3: #{tpu_custom_call.1} parent=1 // loop_header
      %s18 = sphi 0, %s22
      %p19 = scmp.ge.s32.totalorder %s18, 4
      %s26 = sphi 0, %s26
      %s28 = sphi 0, %s26
      %s29 = sphi 0, %s28
      %s43 = sphi 0, %s29
      %s49 = sphi 0, %s51
      %s52 = sphi 0, %s49
      %s53 = sphi 0, %s52
      %s69 = sphi 0, %s53
      %s75 = sphi 0, %s77
      %s78 = sphi 0, %s75
      %s79 = sphi 0, %s78
      %s95 = sphi 0, %s79
      %s99 = sphi 0, %s99
      %s101 = sphi 0, %s99
      %s102 = sphi 0, %s101
      %s116 = sphi 0, %s102
      %s120 = sphi 0, %s120
      %s122 = sphi 0, %s120
      %s123 = sphi 0, %s122
      %s137 = sphi 0, %s123
      %s143 = sphi 0, %s145
      %s146 = sphi 0, %s143
      %s147 = sphi 0, %s146
      %s163 = sphi 0, %s147
    $region4: #{tpu_custom_call.1} parent=1 // loop_header_branch
      %21 = sbr.rel (%p19) target = $region8
    $region5: #{tpu_custom_call.1} parent=1 // loop_body
      %s23 = ssub.s32 %s18, 1
      %s24 = ssub.s32 %s18, 2
      %s25 = sadd.s32 %s18, 1
      %s27 = sadd.s32 %s26, 1
      %p30 = scmp.eq.s32.totalorder %s18, 1
      %p31 = scmp.ne.s32.totalorder %s26, %s28
      %p32 = scmp.eq.s32.totalorder %s18, 0
      %p33 = por %p31, %p32
      %p34 = scmp.ne.s32.totalorder %s26, %s28
      %p35 = scmp.eq.s32.totalorder %s23, 1
      %p36 = por %p34, %p35
      %p37 = scmp.ne.s32.totalorder %s28, %s29
      %p38 = scmp.eq.s32.totalorder %s23, 0
      %p39 = por %p37, %p38
      %p40 = scmp.ne.s32.totalorder %s28, %s29
      %p41 = scmp.eq.s32.totalorder %s24, 1
      %p42 = por %p40, %p41
      %p44 = scmp.ne.s32.totalorder %s29, %s43
      %p45 = scmp.eq.s32.totalorder %s24, 0
      %p46 = por %p44, %p45
      %s47 = ssub.s32 %s18, %s25
      %p48 = scmp.eq.s32.totalorder %s47, 0
      %s50 = sadd.s32 %s49, 1
      %s51 = scalar_select %p48, %s49, %s50
      %p54 = pneg %p48
      %p55 = scmp.eq.s32.totalorder %s18, 1
      %p56 = por %p54, %p55
      %p57 = scmp.ne.s32.totalorder %s49, %s52
      %p58 = scmp.eq.s32.totalorder %s18, 0
      %p59 = por %p57, %p58
      %p60 = scmp.ne.s32.totalorder %s49, %s52
      %p61 = scmp.eq.s32.totalorder %s23, 1
      %p62 = por %p60, %p61
      %p63 = scmp.ne.s32.totalorder %s52, %s53
      %p64 = scmp.eq.s32.totalorder %s23, 0
      %p65 = por %p63, %p64
      %p66 = scmp.ne.s32.totalorder %s52, %s53
      %p67 = scmp.eq.s32.totalorder %s24, 1
      %p68 = por %p66, %p67
      %p70 = scmp.ne.s32.totalorder %s53, %s69
      %p71 = scmp.eq.s32.totalorder %s24, 0
      %p72 = por %p70, %p71
      %s73 = ssub.s32 %s18, %s25
      %p74 = scmp.eq.s32.totalorder %s73, 0
      %s76 = sadd.s32 %s75, 1
      %s77 = scalar_select %p74, %s75, %s76
      %p80 = pneg %p74
      %p81 = scmp.eq.s32.totalorder %s18, 1
      %p82 = por %p80, %p81
      %p83 = scmp.ne.s32.totalorder %s75, %s78
      %p84 = scmp.eq.s32.totalorder %s18, 0
      %p85 = por %p83, %p84
      %p86 = scmp.ne.s32.totalorder %s75, %s78
      %p87 = scmp.eq.s32.totalorder %s23, 1
      %p88 = por %p86, %p87
      %p89 = scmp.ne.s32.totalorder %s78, %s79
      %p90 = scmp.eq.s32.totalorder %s23, 0
      %p91 = por %p89, %p90
      %p92 = scmp.ne.s32.totalorder %s78, %s79
      %p93 = scmp.eq.s32.totalorder %s24, 1
      %p94 = por %p92, %p93
      %p96 = scmp.ne.s32.totalorder %s79, %s95
      %p97 = scmp.eq.s32.totalorder %s24, 0
      %p98 = por %p96, %p97
      %s100 = sadd.s32 %s99, 1
      %p103 = scmp.eq.s32.totalorder %s18, 1
      %p104 = scmp.ne.s32.totalorder %s99, %s101
      %p105 = scmp.eq.s32.totalorder %s18, 0
      %p106 = por %p104, %p105
      %p107 = scmp.ne.s32.totalorder %s99, %s101
      %p108 = scmp.eq.s32.totalorder %s23, 1
      %p109 = por %p107, %p108
      %p110 = scmp.ne.s32.totalorder %s101, %s102
      %p111 = scmp.eq.s32.totalorder %s23, 0
      %p112 = por %p110, %p111
      %p113 = scmp.ne.s32.totalorder %s101, %s102
      %p114 = scmp.eq.s32.totalorder %s24, 1
      %p115 = por %p113, %p114
      %p117 = scmp.ne.s32.totalorder %s102, %s116
      %p118 = scmp.eq.s32.totalorder %s24, 0
      %p119 = por %p117, %p118
      %s121 = sadd.s32 %s120, 1
      %p124 = scmp.eq.s32.totalorder %s18, 1
      %p125 = scmp.ne.s32.totalorder %s120, %s122
      %p126 = scmp.eq.s32.totalorder %s18, 0
      %p127 = por %p125, %p126
      %p128 = scmp.ne.s32.totalorder %s120, %s122
      %p129 = scmp.eq.s32.totalorder %s23, 1
      %p130 = por %p128, %p129
      %p131 = scmp.ne.s32.totalorder %s122, %s123
      %p132 = scmp.eq.s32.totalorder %s23, 0
      %p133 = por %p131, %p132
      %p134 = scmp.ne.s32.totalorder %s122, %s123
      %p135 = scmp.eq.s32.totalorder %s24, 1
      %p136 = por %p134, %p135
      %p138 = scmp.ne.s32.totalorder %s123, %s137
      %p139 = scmp.eq.s32.totalorder %s24, 0
      %p140 = por %p138, %p139
      %s141 = ssub.s32 %s18, %s25
      %p142 = scmp.eq.s32.totalorder %s141, 0
      %s144 = sadd.s32 %s143, 1
      %s145 = scalar_select %p142, %s143, %s144
      %p148 = pneg %p142
      %p149 = scmp.eq.s32.totalorder %s18, 1
      %p150 = por %p148, %p149
      %p151 = scmp.ne.s32.totalorder %s143, %s146
      %p152 = scmp.eq.s32.totalorder %s18, 0
      %p153 = por %p151, %p152
      %p154 = scmp.ne.s32.totalorder %s143, %s146
      %p155 = scmp.eq.s32.totalorder %s23, 1
      %p156 = por %p154, %p155
      %p157 = scmp.ne.s32.totalorder %s146, %s147
      %p158 = scmp.eq.s32.totalorder %s23, 0
      %p159 = por %p157, %p158
      %p160 = scmp.ne.s32.totalorder %s146, %s147
      %p161 = scmp.eq.s32.totalorder %s24, 1
      %p162 = por %p160, %p161
      %p164 = scmp.ne.s32.totalorder %s147, %s163
      %p165 = scmp.eq.s32.totalorder %s24, 0
      %p166 = por %p164, %p165
      %p167 = scmp.le.s32.totalorder 1, %s18
      %p168 = scmp.lt.s32.totalorder %s18, 3
      %p169 = pnand %p167, %p168
      %p170 = pneg %p169
      // Predicated region
      $region9: #{tpu_custom_call.1} parent=5 // pred_check
        _
      $region10: #{tpu_custom_call.1} parent=5 // pred_check_branch
        %172 = sbr.rel (%p169) target = $region12
      $region11: #{tpu_custom_call.1} parent=5 // pred_region
        %s173 = ssub.s32 %s18, 1
        // Predicated region
        $region13: #{tpu_custom_call.1} parent=11 // pred_check
          %p174 = pneg %p39
        $region14: #{tpu_custom_call.1} parent=11 // pred_check_branch
          %176 = sbr.rel (%p174) target = $region16
        $region15: #{tpu_custom_call.1} parent=11 // pred_region
          %s178 = ssub.s32 32, 32
          %179 = vsyncadd [#allocation3], %s178
          %s181 = sshll.u32 [#allocation2], 4
          %s182 = int_to_ptr.vmem [resolvable:$true] %s181
          %184 = dma.hbm_to_vmem [thread:$0]  %s0, 32, %s182, [#allocation3]
        $region16: #{tpu_custom_call.1} parent=11 // pred_fallthru
          _
        // Predicated region
        $region17: #{tpu_custom_call.1} parent=11 // pred_check
          %p185 = pneg %p112
        $region18: #{tpu_custom_call.1} parent=11 // pred_check_branch
          %187 = sbr.rel (%p185) target = $region20
        $region19: #{tpu_custom_call.1} parent=11 // pred_region
          _
        $region20: #{tpu_custom_call.1} parent=11 // pred_fallthru
          _
        // Predicated region
        $region21: #{tpu_custom_call.1} parent=11 // pred_check
          %p188 = pneg %p133
        $region22: #{tpu_custom_call.1} parent=11 // pred_check_branch
          %190 = sbr.rel (%p188) target = $region24
        $region23: #{tpu_custom_call.1} parent=11 // pred_region
          _
        $region24: #{tpu_custom_call.1} parent=11 // pred_fallthru
          _
      $region12: #{tpu_custom_call.1} parent=5 // pred_fallthru
        _
      %p191 = scmp.lt.s32.totalorder %s18, 2
      // Predicated region
      $region25: #{tpu_custom_call.1} parent=5 // pred_check
        %p192 = pneg %p191
      $region26: #{tpu_custom_call.1} parent=5 // pred_check_branch
        %194 = sbr.rel (%p192) target = $region28
      $region27: #{tpu_custom_call.1} parent=5 // pred_region
        // Predicated region
        $region29: #{tpu_custom_call.1} parent=27 // pred_check
          %p195 = pneg %p59
        $region30: #{tpu_custom_call.1} parent=27 // pred_check_branch
          %197 = sbr.rel (%p195) target = $region32
        $region31: #{tpu_custom_call.1} parent=27 // pred_region
          %s198 = sand.u32 %s18, 1
          %s199 = scalar_lea.sflag [#allocation6], %s198
          %s200 = sand.u32 %s49, 1
          %s201 = smul.addr %s200, 512
          %s202 = scalar_lea.vmem [#allocation5], %s201
          %s204 = ssub.s32 8192, 8192
          %205 = vsyncadd %s199, %s204
          %s206 = smul.addr %s18, 128
          %s207 = smul.addr %s206, 64
          %s208 = scalar_lea.hbm %s1, %s207
          %s209 = sshll.u32 %s202, 4
          %s210 = int_to_ptr.vmem [resolvable:$true] %s209
          %215 = dma.hbm_to_vmem [thread:$0]  %s208, 8192, %s210, %s199, 256, 256, 16
        $region32: #{tpu_custom_call.1} parent=27 // pred_fallthru
          _
        // Predicated region
        $region33: #{tpu_custom_call.1} parent=27 // pred_check
          %p216 = pneg %p85
        $region34: #{tpu_custom_call.1} parent=27 // pred_check_branch
          %218 = sbr.rel (%p216) target = $region36
        $region35: #{tpu_custom_call.1} parent=27 // pred_region
          %s219 = sand.u32 %s18, 1
          %s220 = scalar_lea.sflag [#allocation6], %s219
          %s221 = sand.u32 %s75, 1
          %s222 = smul.addr %s221, 4
          %s223 = scalar_lea.vmem [#allocation7], %s222
          %s224 = smul.u32 4, %s18
          %s226 = ssub.s32 64, 64
          %227 = vsyncadd %s220, %s226
          %s228 = smul.addr %s224, 16
          %s229 = scalar_lea.hbm %s2, %s228
          %s231 = sshll.u32 %s223, 4
          %s232 = int_to_ptr.vmem [resolvable:$true] %s231
          %234 = dma.hbm_to_vmem [thread:$0]  %s229, 64, %s232, %s220
        $region36: #{tpu_custom_call.1} parent=27 // pred_fallthru
          _
      $region28: #{tpu_custom_call.1} parent=5 // pred_fallthru
        _
      %p235 = scmp.le.s32.totalorder 1, %s18
      %p236 = scmp.lt.s32.totalorder %s18, 3
      %p237 = pnand %p235, %p236
      %p238 = pneg %p237
      // Predicated region
      $region37: #{tpu_custom_call.1} parent=5 // pred_check
        _
      $region38: #{tpu_custom_call.1} parent=5 // pred_check_branch
        %240 = sbr.rel (%p237) target = $region40
      $region39: #{tpu_custom_call.1} parent=5 // pred_region
        %s241 = ssub.s32 %s18, 1
        // Predicated region
        $region41: #{tpu_custom_call.1} parent=39 // pred_check
          %p242 = pneg %p39
        $region42: #{tpu_custom_call.1} parent=39 // pred_check_branch
          %244 = sbr.rel (%p242) target = $region44
        $region43: #{tpu_custom_call.1} parent=39 // pred_region
          %245 = dma.done [#allocation3], 32
        $region44: #{tpu_custom_call.1} parent=39 // pred_fallthru
          _
        %s246 = sand.u32 %s23, 1
        %s247 = scalar_lea.sflag [#allocation6], %s246
        %s248 = sand.u32 %s52, 1
        %s249 = smul.addr %s248, 512
        %s250 = scalar_lea.vmem [#allocation5], %s249
        // Predicated region
        $region45: #{tpu_custom_call.1} parent=39 // pred_check
          %p251 = pneg %p65
        $region46: #{tpu_custom_call.1} parent=39 // pred_check_branch
          %253 = sbr.rel (%p251) target = $region48
        $region47: #{tpu_custom_call.1} parent=39 // pred_region
          %254 = dma.done %s247, 8192
        $region48: #{tpu_custom_call.1} parent=39 // pred_fallthru
          _
        %s255 = sand.u32 %s23, 1
        %s256 = scalar_lea.sflag [#allocation6], %s255
        %s257 = sand.u32 %s78, 1
        %s258 = smul.addr %s257, 4
        %s259 = scalar_lea.vmem [#allocation7], %s258
        // Predicated region
        $region49: #{tpu_custom_call.1} parent=39 // pred_check
          %p260 = pneg %p91
        $region50: #{tpu_custom_call.1} parent=39 // pred_check_branch
          %262 = sbr.rel (%p260) target = $region52
        $region51: #{tpu_custom_call.1} parent=39 // pred_region
          %263 = dma.done %s256, 64
        $region52: #{tpu_custom_call.1} parent=39 // pred_fallthru
          _
        %p264 = pneg %p39
        %p265 = pneg %p36
        %s266 = sand.u32 %s23, 1
        %s267 = scalar_lea.sflag [#allocation6], %s266
        %s268 = sand.u32 %s52, 1
        %s269 = smul.addr %s268, 512
        %s270 = scalar_lea.vmem [#allocation5], %s269
        %p271 = pneg %p65
        %p272 = pneg %p62
        %s273 = sand.u32 %s23, 1
        %s274 = scalar_lea.sflag [#allocation6], %s273
        %s275 = sand.u32 %s78, 1
        %s276 = smul.addr %s275, 4
        %s277 = scalar_lea.vmem [#allocation7], %s276
        %p278 = pneg %p91
        %p279 = pneg %p88
        %p280 = pneg %p112
        %p281 = pneg %p109
        %p282 = pneg %p133
        %p283 = pneg %p130
        %p284 = pneg %p159
        %p285 = pneg %p156
        %s286 = sand.u32 %s146, 1
        %s287 = scalar_lea.sflag [#allocation4], %s286
        %s288 = sand.u32 %s146, 1
        %s289 = smul.addr %s288, 8
        %s290 = scalar_lea.vmem [#allocation8], %s289
        %s291 = smul.u32 4, %s23
        %s292 = smul.u32 4, %s23
        %v293 = vld [vmem:[#allocation2] sm:$0x3]
        %v294 = vld [vmem:[%s250] sm:$0xff]
        %v295 = vld [vmem:[%s250 + $0x8] sm:$0xff]
        %v296 = vld [vmem:[%s250 + $0x10] sm:$0xff]
        %v297 = vld [vmem:[%s250 + $0x18] sm:$0xff]
        %v298 = vld [vmem:[%s250 + $0x20] sm:$0xff]
        %v299 = vld [vmem:[%s250 + $0x28] sm:$0xff]
        %v300 = vld [vmem:[%s250 + $0x30] sm:$0xff]
        %v301 = vld [vmem:[%s250 + $0x38] sm:$0xff]
        %v302 = vld [vmem:[%s250 + $0x40] sm:$0xff]
        %v303 = vld [vmem:[%s250 + $0x48] sm:$0xff]
        %v304 = vld [vmem:[%s250 + $0x50] sm:$0xff]
        %v305 = vld [vmem:[%s250 + $0x58] sm:$0xff]
        %v306 = vld [vmem:[%s250 + $0x60] sm:$0xff]
        %v307 = vld [vmem:[%s250 + $0x68] sm:$0xff]
        %v308 = vld [vmem:[%s250 + $0x70] sm:$0xff]
        %v309 = vld [vmem:[%s250 + $0x78] sm:$0xff]
        %v310 = vld [vmem:[%s250 + $0x80] sm:$0xff]
        %v311 = vld [vmem:[%s250 + $0x88] sm:$0xff]
        %v312 = vld [vmem:[%s250 + $0x90] sm:$0xff]
        %v313 = vld [vmem:[%s250 + $0x98] sm:$0xff]
        %v314 = vld [vmem:[%s250 + $0xa0] sm:$0xff]
        %v315 = vld [vmem:[%s250 + $0xa8] sm:$0xff]
        %v316 = vld [vmem:[%s250 + $0xb0] sm:$0xff]
        %v317 = vld [vmem:[%s250 + $0xb8] sm:$0xff]
        %v318 = vld [vmem:[%s250 + $0xc0] sm:$0xff]
        %v319 = vld [vmem:[%s250 + $0xc8] sm:$0xff]
        %v320 = vld [vmem:[%s250 + $0xd0] sm:$0xff]
        %v321 = vld [vmem:[%s250 + $0xd8] sm:$0xff]
        %v322 = vld [vmem:[%s250 + $0xe0] sm:$0xff]
        %v323 = vld [vmem:[%s250 + $0xe8] sm:$0xff]
        %v324 = vld [vmem:[%s250 + $0xf0] sm:$0xff]
        %v325 = vld [vmem:[%s250 + $0xf8] sm:$0xff]
        %v326 = vld [vmem:[%s250 + $0x100] sm:$0xff]
        %v327 = vld [vmem:[%s250 + $0x108] sm:$0xff]
        %v328 = vld [vmem:[%s250 + $0x110] sm:$0xff]
        %v329 = vld [vmem:[%s250 + $0x118] sm:$0xff]
        %v330 = vld [vmem:[%s250 + $0x120] sm:$0xff]
        %v331 = vld [vmem:[%s250 + $0x128] sm:$0xff]
        %v332 = vld [vmem:[%s250 + $0x130] sm:$0xff]
        %v333 = vld [vmem:[%s250 + $0x138] sm:$0xff]
        %v334 = vld [vmem:[%s250 + $0x140] sm:$0xff]
        %v335 = vld [vmem:[%s250 + $0x148] sm:$0xff]
        %v336 = vld [vmem:[%s250 + $0x150] sm:$0xff]
        %v337 = vld [vmem:[%s250 + $0x158] sm:$0xff]
        %v338 = vld [vmem:[%s250 + $0x160] sm:$0xff]
        %v339 = vld [vmem:[%s250 + $0x168] sm:$0xff]
        %v340 = vld [vmem:[%s250 + $0x170] sm:$0xff]
        %v341 = vld [vmem:[%s250 + $0x178] sm:$0xff]
        %v342 = vld [vmem:[%s250 + $0x180] sm:$0xff]
        %v343 = vld [vmem:[%s250 + $0x188] sm:$0xff]
        %v344 = vld [vmem:[%s250 + $0x190] sm:$0xff]
        %v345 = vld [vmem:[%s250 + $0x198] sm:$0xff]
        %v346 = vld [vmem:[%s250 + $0x1a0] sm:$0xff]
        %v347 = vld [vmem:[%s250 + $0x1a8] sm:$0xff]
        %v348 = vld [vmem:[%s250 + $0x1b0] sm:$0xff]
        %v349 = vld [vmem:[%s250 + $0x1b8] sm:$0xff]
        %v350 = vld [vmem:[%s250 + $0x1c0] sm:$0xff]
        %v351 = vld [vmem:[%s250 + $0x1c8] sm:$0xff]
        %v352 = vld [vmem:[%s250 + $0x1d0] sm:$0xff]
        %v353 = vld [vmem:[%s250 + $0x1d8] sm:$0xff]
        %v354 = vld [vmem:[%s250 + $0x1e0] sm:$0xff]
        %v355 = vld [vmem:[%s250 + $0x1e8] sm:$0xff]
        %v356 = vld [vmem:[%s250 + $0x1f0] sm:$0xff]
        %v357 = vld [vmem:[%s250 + $0x1f8] sm:$0xff]
        %v358 = vld [vmem:[%s259] sm:$0xf]
        %v360 = vlaneseq
        %v361 = vshrl.u32 %v360, 7
        %v362 = vsub.s32 0, %v361
        %v363 = vrot.slane %v358, %v362
        %v364 = vlaneseq
        %v365 = vshrl.u32 %v364, 7
        %v366 = vsub.s32 1, %v365
        %v367 = vrot.slane %v358, %v366
        %v368 = vlaneseq
        %v369 = vshrl.u32 %v368, 7
        %v370 = vsub.s32 2, %v369
        %v371 = vrot.slane %v358, %v370
        %v372 = vlaneseq
        %v373 = vshrl.u32 %v372, 7
        %v374 = vsub.s32 3, %v373
        %v375 = vrot.slane %v358, %v374
        %v382 = vunpack.c.l.s4 1966171168
        %v383 = vunpack.c.0.s8 %v382
        %v384 = vlaneseq
        %v385 = vshrl.u32 %v384, 7
        %v386 = vsub.s32 %v383, %v385
        %v387 = vrot.slane %v293, %v386
        %v388 = vcombine.high %v387, %v387
        %v390 = vunpack.c.l.s4 1966171168
        %v391 = vunpack.c.0.s8 %v390
        %v392 = vlaneseq
        %v393 = vshrl.u32 %v392, 7
        %v394 = vsub.s32 %v391, %v393
        %v395 = vrot.slane %v387, %v394
        %v397 = vunpack.c.l.s4 1966171168
        %v398 = vunpack.c.0.s8 %v397
        %v399 = vlaneseq
        %v400 = vshrl.u32 %v399, 7
        %v401 = vsub.s32 %v398, %v400
        %v402 = vrot.slane %v388, %v401
        %v469 = vunpack.c.l.b16 %v294
        %v470 = vunpack.c.h.b16 %v294
        %v471 = vunpack.c.l.b16 %v295
        %v472 = vunpack.c.h.b16 %v295
        %v473 = vunpack.c.l.b16 %v296
        %v474 = vunpack.c.h.b16 %v296
        %v475 = vunpack.c.l.b16 %v297
        %v476 = vunpack.c.h.b16 %v297
        %v477 = vunpack.c.l.b16 %v298
        %v478 = vunpack.c.h.b16 %v298
        %v479 = vunpack.c.l.b16 %v299
        %v480 = vunpack.c.h.b16 %v299
        %v481 = vunpack.c.l.b16 %v300
        %v482 = vunpack.c.h.b16 %v300
        %v483 = vunpack.c.l.b16 %v301
        %v484 = vunpack.c.h.b16 %v301
        %v485 = vunpack.c.l.b16 %v302
        %v486 = vunpack.c.h.b16 %v302
        %v487 = vunpack.c.l.b16 %v303
        %v488 = vunpack.c.h.b16 %v303
        %v489 = vunpack.c.l.b16 %v304
        %v490 = vunpack.c.h.b16 %v304
        %v491 = vunpack.c.l.b16 %v305
        %v492 = vunpack.c.h.b16 %v305
        %v493 = vunpack.c.l.b16 %v306
        %v494 = vunpack.c.h.b16 %v306
        %v495 = vunpack.c.l.b16 %v307
        %v496 = vunpack.c.h.b16 %v307
        %v497 = vunpack.c.l.b16 %v308
        %v498 = vunpack.c.h.b16 %v308
        %v499 = vunpack.c.l.b16 %v309
        %v500 = vunpack.c.h.b16 %v309
        %v501 = vunpack.c.l.b16 %v310
        %v502 = vunpack.c.h.b16 %v310
        %v503 = vunpack.c.l.b16 %v311
        %v504 = vunpack.c.h.b16 %v311
        %v505 = vunpack.c.l.b16 %v312
        %v506 = vunpack.c.h.b16 %v312
        %v507 = vunpack.c.l.b16 %v313
        %v508 = vunpack.c.h.b16 %v313
        %v509 = vunpack.c.l.b16 %v314
        %v510 = vunpack.c.h.b16 %v314
        %v511 = vunpack.c.l.b16 %v315
        %v512 = vunpack.c.h.b16 %v315
        %v513 = vunpack.c.l.b16 %v316
        %v514 = vunpack.c.h.b16 %v316
        %v515 = vunpack.c.l.b16 %v317
        %v516 = vunpack.c.h.b16 %v317
        %v517 = vunpack.c.l.b16 %v318
        %v518 = vunpack.c.h.b16 %v318
        %v519 = vunpack.c.l.b16 %v319
        %v520 = vunpack.c.h.b16 %v319
        %v521 = vunpack.c.l.b16 %v320
        %v522 = vunpack.c.h.b16 %v320
        %v523 = vunpack.c.l.b16 %v321
        %v524 = vunpack.c.h.b16 %v321
        %v525 = vunpack.c.l.b16 %v322
        %v526 = vunpack.c.h.b16 %v322
        %v527 = vunpack.c.l.b16 %v323
        %v528 = vunpack.c.h.b16 %v323
        %v529 = vunpack.c.l.b16 %v324
        %v530 = vunpack.c.h.b16 %v324
        %v531 = vunpack.c.l.b16 %v325
        %v532 = vunpack.c.h.b16 %v325
        %v533 = vunpack.c.l.b16 %v326
        %v534 = vunpack.c.h.b16 %v326
        %v535 = vunpack.c.l.b16 %v327
        %v536 = vunpack.c.h.b16 %v327
        %v537 = vunpack.c.l.b16 %v328
        %v538 = vunpack.c.h.b16 %v328
        %v539 = vunpack.c.l.b16 %v329
        %v540 = vunpack.c.h.b16 %v329
        %v541 = vunpack.c.l.b16 %v330
        %v542 = vunpack.c.h.b16 %v330
        %v543 = vunpack.c.l.b16 %v331
        %v544 = vunpack.c.h.b16 %v331
        %v545 = vunpack.c.l.b16 %v332
        %v546 = vunpack.c.h.b16 %v332
        %v547 = vunpack.c.l.b16 %v333
        %v548 = vunpack.c.h.b16 %v333
        %v549 = vunpack.c.l.b16 %v334
        %v550 = vunpack.c.h.b16 %v334
        %v551 = vunpack.c.l.b16 %v335
        %v552 = vunpack.c.h.b16 %v335
        %v553 = vunpack.c.l.b16 %v336
        %v554 = vunpack.c.h.b16 %v336
        %v555 = vunpack.c.l.b16 %v337
        %v556 = vunpack.c.h.b16 %v337
        %v557 = vunpack.c.l.b16 %v338
        %v558 = vunpack.c.h.b16 %v338
        %v559 = vunpack.c.l.b16 %v339
        %v560 = vunpack.c.h.b16 %v339
        %v561 = vunpack.c.l.b16 %v340
        %v562 = vunpack.c.h.b16 %v340
        %v563 = vunpack.c.l.b16 %v341
        %v564 = vunpack.c.h.b16 %v341
        %v565 = vunpack.c.l.b16 %v342
        %v566 = vunpack.c.h.b16 %v342
        %v567 = vunpack.c.l.b16 %v343
        %v568 = vunpack.c.h.b16 %v343
        %v569 = vunpack.c.l.b16 %v344
        %v570 = vunpack.c.h.b16 %v344
        %v571 = vunpack.c.l.b16 %v345
        %v572 = vunpack.c.h.b16 %v345
        %v573 = vunpack.c.l.b16 %v346
        %v574 = vunpack.c.h.b16 %v346
        %v575 = vunpack.c.l.b16 %v347
        %v576 = vunpack.c.h.b16 %v347
        %v577 = vunpack.c.l.b16 %v348
        %v578 = vunpack.c.h.b16 %v348
        %v579 = vunpack.c.l.b16 %v349
        %v580 = vunpack.c.h.b16 %v349
        %v581 = vunpack.c.l.b16 %v350
        %v582 = vunpack.c.h.b16 %v350
        %v583 = vunpack.c.l.b16 %v351
        %v584 = vunpack.c.h.b16 %v351
        %v585 = vunpack.c.l.b16 %v352
        %v586 = vunpack.c.h.b16 %v352
        %v587 = vunpack.c.l.b16 %v353
        %v588 = vunpack.c.h.b16 %v353
        %v589 = vunpack.c.l.b16 %v354
        %v590 = vunpack.c.h.b16 %v354
        %v591 = vunpack.c.l.b16 %v355
        %v592 = vunpack.c.h.b16 %v355
        %v593 = vunpack.c.l.b16 %v356
        %v594 = vunpack.c.h.b16 %v356
        %v595 = vunpack.c.l.b16 %v357
        %v596 = vunpack.c.h.b16 %v357
        %v597 = vpack.c.b16 %v473, %v469
        %v598 = vpack.c.b16 %v474, %v470
        %v599 = vpack.c.b16 %v475, %v471
        %v600 = vpack.c.b16 %v476, %v472
        %v601 = vpack.c.b16 %v481, %v477
        %v602 = vpack.c.b16 %v482, %v478
        %v603 = vpack.c.b16 %v483, %v479
        %v604 = vpack.c.b16 %v484, %v480
        %v605 = vpack.c.b16 %v489, %v485
        %v606 = vpack.c.b16 %v490, %v486
        %v607 = vpack.c.b16 %v491, %v487
        %v608 = vpack.c.b16 %v492, %v488
        %v609 = vpack.c.b16 %v497, %v493
        %v610 = vpack.c.b16 %v498, %v494
        %v611 = vpack.c.b16 %v499, %v495
        %v612 = vpack.c.b16 %v500, %v496
        %v613 = vpack.c.b16 %v505, %v501
        %v614 = vpack.c.b16 %v506, %v502
        %v615 = vpack.c.b16 %v507, %v503
        %v616 = vpack.c.b16 %v508, %v504
        %v617 = vpack.c.b16 %v513, %v509
        %v618 = vpack.c.b16 %v514, %v510
        %v619 = vpack.c.b16 %v515, %v511
        %v620 = vpack.c.b16 %v516, %v512
        %v621 = vpack.c.b16 %v521, %v517
        %v622 = vpack.c.b16 %v522, %v518
        %v623 = vpack.c.b16 %v523, %v519
        %v624 = vpack.c.b16 %v524, %v520
        %v625 = vpack.c.b16 %v529, %v525
        %v626 = vpack.c.b16 %v530, %v526
        %v627 = vpack.c.b16 %v531, %v527
        %v628 = vpack.c.b16 %v532, %v528
        %v629 = vpack.c.b16 %v537, %v533
        %v630 = vpack.c.b16 %v538, %v534
        %v631 = vpack.c.b16 %v539, %v535
        %v632 = vpack.c.b16 %v540, %v536
        %v633 = vpack.c.b16 %v545, %v541
        %v634 = vpack.c.b16 %v546, %v542
        %v635 = vpack.c.b16 %v547, %v543
        %v636 = vpack.c.b16 %v548, %v544
        %v637 = vpack.c.b16 %v553, %v549
        %v638 = vpack.c.b16 %v554, %v550
        %v639 = vpack.c.b16 %v555, %v551
        %v640 = vpack.c.b16 %v556, %v552
        %v641 = vpack.c.b16 %v561, %v557
        %v642 = vpack.c.b16 %v562, %v558
        %v643 = vpack.c.b16 %v563, %v559
        %v644 = vpack.c.b16 %v564, %v560
        %v645 = vpack.c.b16 %v569, %v565
        %v646 = vpack.c.b16 %v570, %v566
        %v647 = vpack.c.b16 %v571, %v567
        %v648 = vpack.c.b16 %v572, %v568
        %v649 = vpack.c.b16 %v577, %v573
        %v650 = vpack.c.b16 %v578, %v574
        %v651 = vpack.c.b16 %v579, %v575
        %v652 = vpack.c.b16 %v580, %v576
        %v653 = vpack.c.b16 %v585, %v581
        %v654 = vpack.c.b16 %v586, %v582
        %v655 = vpack.c.b16 %v587, %v583
        %v656 = vpack.c.b16 %v588, %v584
        %v657 = vpack.c.b16 %v593, %v589
        %v658 = vpack.c.b16 %v594, %v590
        %v659 = vpack.c.b16 %v595, %v591
        %v660 = vpack.c.b16 %v596, %v592
        %725 = vmatprep.subr.bf16.mxu0 %v598
        %726 = vmatpush1.bf16.msra.mxu0 %v597
        %727 = vmatprep.subr.bf16.mxu0 %v602
        %728 = vmatpush1.bf16.msra.mxu0 %v601
        %729 = vmatprep.subr.bf16.mxu0 %v606
        %730 = vmatpush1.bf16.msra.mxu0 %v605
        %731 = vmatprep.subr.bf16.mxu0 %v610
        %732 = vmatpush1.bf16.msra.mxu0 %v609
        %733 = vmatprep.subr.bf16.mxu0 %v614
        %734 = vmatpush1.bf16.msra.mxu0 %v613
        %735 = vmatprep.subr.bf16.mxu0 %v618
        %736 = vmatpush1.bf16.msra.mxu0 %v617
        %737 = vmatprep.subr.bf16.mxu0 %v622
        %738 = vmatpush1.bf16.msra.mxu0 %v621
        %739 = vmatprep.subr.bf16.mxu0 %v626
        %740 = vmatpush1.bf16.msra.mxu0 %v625
        %741 = vmatprep.subr.bf16.mxu0 %v630
        %742 = vmatpush1.bf16.msra.mxu0 %v629
        %743 = vmatprep.subr.bf16.mxu0 %v634
        %744 = vmatpush1.bf16.msra.mxu0 %v633
        %745 = vmatprep.subr.bf16.mxu0 %v638
        %746 = vmatpush1.bf16.msra.mxu0 %v637
        %747 = vmatprep.subr.bf16.mxu0 %v642
        %748 = vmatpush1.bf16.msra.mxu0 %v641
        %749 = vmatprep.subr.bf16.mxu0 %v646
        %750 = vmatpush1.bf16.msra.mxu0 %v645
        %751 = vmatprep.subr.bf16.mxu0 %v650
        %752 = vmatpush1.bf16.msra.mxu0 %v649
        %753 = vmatprep.subr.bf16.mxu0 %v654
        %754 = vmatpush1.bf16.msra.mxu0 %v653
        %755 = vmatprep.subr.bf16.mxu0 %v658
        %756 = vmatpush1.bf16.msra.mxu0 %v657
        %757 = vmatprep.mubr.bf16.mxu0 %v402
        %758 = vmatmul.mubr.bf16.gmra.mrb[0].mxu0 %v395
        %v759 = vpop.f32.mrb[0].mxu0
        %v760 = vadd.f32 %v363, %v759
        %v761 = vpop.f32.mrb[0].mxu0
        %v762 = vadd.f32 %v367, %v761
        %v763 = vpop.f32.mrb[0].mxu0
        %v764 = vpop.f32.mrb[0].mxu0
        %765 = vdwg.mxu0
        %766 = vmatprep.subr.bf16.mxu0 %v600
        %767 = vmatpush1.bf16.msra.mxu0 %v599
        %768 = vmatprep.subr.bf16.mxu0 %v604
        %769 = vmatpush1.bf16.msra.mxu0 %v603
        %770 = vmatprep.subr.bf16.mxu0 %v608
        %771 = vmatpush1.bf16.msra.mxu0 %v607
        %772 = vmatprep.subr.bf16.mxu0 %v612
        %773 = vmatpush1.bf16.msra.mxu0 %v611
        %774 = vmatprep.subr.bf16.mxu0 %v616
        %775 = vmatpush1.bf16.msra.mxu0 %v615
        %776 = vmatprep.subr.bf16.mxu0 %v620
        %777 = vmatpush1.bf16.msra.mxu0 %v619
        %778 = vmatprep.subr.bf16.mxu0 %v624
        %779 = vmatpush1.bf16.msra.mxu0 %v623
        %780 = vmatprep.subr.bf16.mxu0 %v628
        %781 = vmatpush1.bf16.msra.mxu0 %v627
        %782 = vmatprep.subr.bf16.mxu0 %v632
        %783 = vmatpush1.bf16.msra.mxu0 %v631
        %784 = vmatprep.subr.bf16.mxu0 %v636
        %785 = vmatpush1.bf16.msra.mxu0 %v635
        %786 = vmatprep.subr.bf16.mxu0 %v640
        %787 = vmatpush1.bf16.msra.mxu0 %v639
        %788 = vmatprep.subr.bf16.mxu0 %v644
        %789 = vmatpush1.bf16.msra.mxu0 %v643
        %790 = vmatprep.subr.bf16.mxu0 %v648
        %791 = vmatpush1.bf16.msra.mxu0 %v647
        %792 = vmatprep.subr.bf16.mxu0 %v652
        %793 = vmatpush1.bf16.msra.mxu0 %v651
        %794 = vmatprep.subr.bf16.mxu0 %v656
        %795 = vmatpush1.bf16.msra.mxu0 %v655
        %796 = vmatprep.subr.bf16.mxu0 %v660
        %797 = vmatpush1.bf16.msra.mxu0 %v659
        %798 = vmatprep.mubr.bf16.mxu0 %v402
        %799 = vmatmul.mubr.bf16.gmra.mrb[0].mxu0 %v395
        %v800 = vpop.f32.mrb[0].mxu0
        %v801 = vadd.f32 %v371, %v800
        %v802 = vpop.f32.mrb[0].mxu0
        %v803 = vadd.f32 %v375, %v802
        %v804 = vpop.f32.mrb[0].mxu0
        %v805 = vpop.f32.mrb[0].mxu0
        %806 = vdwg.mxu0
        %vm807 = vcmask 1041408
        %v808 = vsel %vm807, %v760, 0.0
        %v809 = vsel %vm807, %v762, 0.0
        %v810 = vadd.f32 %v808, %v809
        %811 = vadd.xlane.f32.xlu0 %v810
        %v812 = vpop.xlane.xlu0 %811
        %v813 = vrcp.pop 256.0
        %v814 = vmul.f32 %v812, %v813
        %v815 = vsub.f32 %v760, %v814
        %v816 = vsub.f32 %v762, %v814
        %v817 = vmul.f32 %v815, %v815
        %v818 = vmul.f32 %v816, %v816
        %v819 = vsel %vm807, %v817, 0.0
        %v820 = vsel %vm807, %v818, 0.0
        %v821 = vadd.f32 %v819, %v820
        %822 = vadd.xlane.f32.xlu0 %v821
        %v823 = vpop.xlane.xlu0 %822
        %v824 = vmul.f32 %v823, %v813
        %v825 = vadd.f32 %v824, 1e-05
        %v826 = vrsqrt.pop %v825
        %v827 = vmul.f32 %v815, %v826
        %v828 = vmul.f32 %v816, %v826
        %v829 = vsel %vm807, %v801, 0.0
        %v830 = vsel %vm807, %v803, 0.0
        %v831 = vadd.f32 %v829, %v830
        %832 = vadd.xlane.f32.xlu0 %v831
        %v833 = vpop.xlane.xlu0 %832
        %v834 = vmul.f32 %v833, %v813
        %v835 = vsub.f32 %v801, %v834
        %v836 = vsub.f32 %v803, %v834
        %v837 = vmul.f32 %v835, %v835
        %v838 = vmul.f32 %v836, %v836
        %v839 = vsel %vm807, %v837, 0.0
        %v840 = vsel %vm807, %v838, 0.0
        %v841 = vadd.f32 %v839, %v840
        %842 = vadd.xlane.f32.xlu0 %v841
        %v843 = vpop.xlane.xlu0 %842
        %v844 = vmul.f32 %v843, %v813
        %v845 = vadd.f32 %v844, 1e-05
        %v846 = vrsqrt.pop %v845
        %v847 = vmul.f32 %v835, %v846
        %v848 = vmul.f32 %v836, %v846
        %v849 = vld [vmem:[%s3] sm:$0xf]
        %v850 = vld [vmem:[%s4] sm:$0xf]
        %v852 = vlaneseq
        %v853 = vshrl.u32 %v852, 7
        %v854 = vsub.s32 0, %v853
        %v855 = vrot.slane %v849, %v854
        %v856 = vlaneseq
        %v857 = vshrl.u32 %v856, 7
        %v858 = vsub.s32 1, %v857
        %v859 = vrot.slane %v849, %v858
        %v860 = vlaneseq
        %v861 = vshrl.u32 %v860, 7
        %v862 = vsub.s32 2, %v861
        %v863 = vrot.slane %v849, %v862
        %v864 = vlaneseq
        %v865 = vshrl.u32 %v864, 7
        %v866 = vsub.s32 3, %v865
        %v867 = vrot.slane %v849, %v866
        %v872 = vmul.f32 %v827, %v855
        %v873 = vmul.f32 %v828, %v859
        %v874 = vmul.f32 %v847, %v863
        %v875 = vmul.f32 %v848, %v867
        %v877 = vlaneseq
        %v878 = vshrl.u32 %v877, 7
        %v879 = vsub.s32 0, %v878
        %v880 = vrot.slane %v850, %v879
        %v881 = vlaneseq
        %v882 = vshrl.u32 %v881, 7
        %v883 = vsub.s32 1, %v882
        %v884 = vrot.slane %v850, %v883
        %v885 = vlaneseq
        %v886 = vshrl.u32 %v885, 7
        %v887 = vsub.s32 2, %v886
        %v888 = vrot.slane %v850, %v887
        %v889 = vlaneseq
        %v890 = vshrl.u32 %v889, 7
        %v891 = vsub.s32 3, %v890
        %v892 = vrot.slane %v850, %v891
        %v897 = vadd.f32 %v872, %v880
        %v898 = vadd.f32 %v873, %v884
        %v899 = vadd.f32 %v874, %v888
        %v900 = vadd.f32 %v875, %v892
        %v905 = vcombine.low %v897, %v898
        %v906 = vcombine.low %v899, %v900
        %v908 = vunpack.c.l.s4 1983009808
        %v909 = vunpack.c.0.s8 %v908
        %v910 = vlaneseq
        %v911 = vshrl.u32 %v910, 7
        %v912 = vsub.s32 %v909, %v911
        %v913 = vrot.slane %v905, %v912
        %v915 = vunpack.c.l.s4 1983009808
        %v916 = vunpack.c.0.s8 %v915
        %v917 = vlaneseq
        %v918 = vshrl.u32 %v917, 7
        %v919 = vsub.s32 %v916, %v918
        %v920 = vrot.slane %v906, %v919
        %v921 = vcombine.low %v913, %v920
        %923 = vst [vmem:[%s290] sm:$0xff] %v921
        %s924 = sand.u32 %s146, 1
        %s925 = scalar_lea.sflag [#allocation4], %s924
        %s926 = sand.u32 %s146, 1
        %s927 = smul.addr %s926, 8
        %s928 = scalar_lea.vmem [#allocation8], %s927
        // Predicated region
        $region53: #{tpu_custom_call.1} parent=39 // pred_check
          %p929 = pneg %p156
        $region54: #{tpu_custom_call.1} parent=39 // pred_check_branch
          %931 = sbr.rel (%p929) target = $region56
        $region55: #{tpu_custom_call.1} parent=39 // pred_region
          %s932 = smul.u32 4, %s23
          %s934 = ssub.s32 128, 128
          %935 = vsyncadd %s925, %s934
          %s936 = smul.addr %s932, 32
          %s937 = scalar_lea.hbm %s5, %s936
          %s939 = sshll.u32 %s928, 4
          %s940 = int_to_ptr.vmem [resolvable:$true] %s939
          %942 = dma.vmem_to_hbm [thread:$0]  %s940, 128, %s937, %s925
        $region56: #{tpu_custom_call.1} parent=39 // pred_fallthru
          _
      $region40: #{tpu_custom_call.1} parent=5 // pred_fallthru
        _
      %p943 = scmp.le.s32.totalorder 2, %s18
      // Predicated region
      $region57: #{tpu_custom_call.1} parent=5 // pred_check
        %p944 = pneg %p943
      $region58: #{tpu_custom_call.1} parent=5 // pred_check_branch
        %946 = sbr.rel (%p944) target = $region60
      $region59: #{tpu_custom_call.1} parent=5 // pred_region
        %s947 = ssub.s32 %s18, 2
        // Predicated region
        $region61: #{tpu_custom_call.1} parent=59 // pred_check
          %p948 = pneg %p162
        $region62: #{tpu_custom_call.1} parent=59 // pred_check_branch
          %950 = sbr.rel (%p948) target = $region64
        $region63: #{tpu_custom_call.1} parent=59 // pred_region
          %s951 = sand.u32 %s147, 1
          %s952 = scalar_lea.sflag [#allocation4], %s951
          %s953 = sand.u32 %s147, 1
          %s954 = smul.addr %s953, 8
          %s955 = scalar_lea.vmem [#allocation8], %s954
          %956 = dma.done %s952, 128
        $region64: #{tpu_custom_call.1} parent=59 // pred_fallthru
          _
      $region60: #{tpu_custom_call.1} parent=5 // pred_fallthru
        _
    $region6: #{tpu_custom_call.1} parent=1 // loop_footer
      %s22 = sadd.s32 1, %s18
    $region7: #{tpu_custom_call.1} parent=1 // loop_footer_branch
      %17 = sbr.rel target = $region3
    $region8: #{tpu_custom_call.1} parent=1 // loop_exit
      _
    %957 = vsyncpa [#allocation3], 1
    %s958 = scalar_lea.sflag [#allocation3], 1
    %959 = vsyncpa %s958, 1
    %960 = vsyncpa [#allocation6], 1
    %s961 = scalar_lea.sflag [#allocation6], 1
    %962 = vsyncpa %s961, 1
    %963 = vsyncpa [#allocation4], 1
    %s964 = scalar_lea.sflag [#allocation4], 1
    %965 = vsyncpa %s964, 1

</llo_original>
